<compile_context>
chip_gen: v7x
topology: tpu7x:2x2x1
jax: 0.10.0
libtpu: 0.0.40
codegen_flags: <defaults>
</compile_context>

<pallas_src>
import functools

import jax
import jax.numpy as jnp
from jax.experimental import pallas as pl
from jax.experimental.pallas import tpu as pltpu


_LANES = 128
_SUBLANES = 8


def _chip_config():
    """Return (num TensorCores to shard across, max rows per block tile)."""
    try:
        kind = jax.devices()[0].device_kind.lower()
    except Exception:
        kind = ""
    if "v6" in kind:
        # v6e: 1 TC, 32 MiB default scoped VMEM -> 4 MiB/input block x 2 bufs.
        return 1, 8192
    if "7" in kind:
        # v7x: 2 TCs/chip, 32 MiB default scoped VMEM (64 MiB physical).
        return 2, 8192
    # v5e and anything unknown: 1 TC, 16 MiB default scoped VMEM.
    return 1, 4096


def _lad_kernel(x_ref, y_ref, o_ref, acc_ref, *, tm, rows, bpc, inv_size,
                need_mask_path):
    c = pl.program_id(0)   # TensorCore shard (CORE_PARALLEL on multi-TC chips)
    i = pl.program_id(1)   # reduction over row-blocks ("arbitrary")

    @pl.when(i == 0)
    def _():
        acc_ref[...] = jnp.zeros_like(acc_ref)

    ad = jnp.abs(x_ref[...].astype(jnp.float32) -
                 y_ref[...].astype(jnp.float32))

    def accumulate(v):
        # VPU-only partial reduction of the (tm, 128) block into the resident
        # (8, 128) accumulator; sublane-group aligned so it lowers to a pure
        # vadd chain (no cross-lane work in the steady-state loop).
        acc_ref[...] += v.reshape(tm // _SUBLANES, _SUBLANES, _LANES).sum(axis=0)

    if need_mask_path:
        g = c * bpc + i            # logical row-block index
        block_end = g * tm + tm

        @pl.when(block_end <= rows)        # fast path: fully in-range block
        def _():
            accumulate(ad)

        @pl.when(block_end > rows)         # partial tail / clamped OOB block
        def _():
            row_ids = g * tm + jax.lax.broadcasted_iota(
                jnp.int32, (tm, _LANES), 0)
            accumulate(jnp.where(row_ids < rows, ad, 0.0))
    else:
        accumulate(ad)

    @pl.when(i == pl.num_programs(1) - 1)
    def _():
        # Lane-dense (8,128) partial written once per core; 1/size hoisted.
        o_ref[...] = acc_ref[...] * inv_size


def lad_loss(x, y, reduction="mean"):
    """Pallas implementation of LAD.forward."""
    assert x.shape == y.shape
    if reduction != "mean":
        # Matches the PyTorch module: no reduction -> elementwise |x - y|.
        return jnp.abs(x - y)

    size = y.shape[0]            # y.size()[0] in the PyTorch module
    inv_size = 1.0 / float(size)

    xf = x.reshape(-1)
    yf = y.reshape(-1)
    n = xf.shape[0]

    rows = n // _LANES
    tail = n - rows * _LANES

    # <=127-element unaligned remainder: tiny plain-JAX reduction.  Replaces
    # the previous full-array jnp.pad, which re-read + re-wrote both inputs.
    tail_sum = None
    if tail:
        tail_sum = jnp.sum(
            jnp.abs(xf[rows * _LANES:].astype(jnp.float32) -
                    yf[rows * _LANES:].astype(jnp.float32))
        ) * jnp.float32(inv_size)

    if rows == 0:
        return tail_sum if tail else jnp.float32(0.0)

    if tail:
        # TODO(synk): the aligned-prefix slice may still materialize one copy
        # per input (allow_input_fusion could fold it into the kernel DMAs);
        # aligned NCHW shapes take the copy-free reshape path below.
        x2 = xf[: rows * _LANES].reshape(rows, _LANES)
        y2 = yf[: rows * _LANES].reshape(rows, _LANES)
    else:
        x2 = xf.reshape(rows, _LANES)
        y2 = yf.reshape(rows, _LANES)

    ncores, tm_cap = _chip_config()

    # Largest row tile fitting the generation's default scoped-VMEM budget
    # with 2 inputs x 2 pipeline buffers.  (Pipeline depth 3 via pl.Buffered
    # is a knob to sweep only if profiling shows exposed DMA at step edges.)
    tm = min(tm_cap, ((rows + _SUBLANES - 1) // _SUBLANES) * _SUBLANES)
    nblocks = pl.cdiv(rows, tm)
    if nblocks < ncores:
        ncores = 1               # not enough row-blocks to feed both cores

    def run(nc):
        bpc = pl.cdiv(nblocks, nc)                    # row-blocks per core
        need_mask_path = (rows % tm != 0) or (nc * bpc != nblocks)

        if nc * bpc == nblocks:
            def in_map(c, i):
                return (c * bpc + i, 0)
        else:
            # Clamp so a fully out-of-range block of the core split still DMAs
            # in-bounds data; its contribution is masked to zero in-kernel.
            def in_map(c, i):
                return (jnp.minimum(c * bpc + i, nblocks - 1), 0)

        if nc > 1:
            # CORE_PARALLEL is what actually shards a grid axis across the two
            # TensorCores on v7x (plain "parallel" does not change codegen).
            core_sem = getattr(pltpu, "CORE_PARALLEL", "parallel")
            red_sem = getattr(pltpu, "ARBITRARY", "arbitrary")
        else:
            core_sem = "arbitrary"
            red_sem = "arbitrary"

        kernel = functools.partial(
            _lad_kernel, tm=tm, rows=rows, bpc=bpc, inv_size=inv_size,
            need_mask_path=need_mask_path)

        return pl.pallas_call(
            kernel,
            out_shape=jax.ShapeDtypeStruct((nc * _SUBLANES, _LANES),
                                           jnp.float32),
            grid_spec=pltpu.PrefetchScalarGridSpec(
                num_scalar_prefetch=0,
                grid=(nc, bpc),
                in_specs=[
                    pl.BlockSpec((tm, _LANES), in_map),
                    pl.BlockSpec((tm, _LANES), in_map),
                ],
                out_specs=pl.BlockSpec((_SUBLANES, _LANES),
                                       lambda c, i: (c, 0)),
                scratch_shapes=[pltpu.VMEM((_SUBLANES, _LANES), jnp.float32)],
            ),
            compiler_params=pltpu.CompilerParams(
                dimension_semantics=(core_sem, red_sem)),
        )(x2, y2)

    if ncores > 1:
        try:
            partials = run(ncores)
        except Exception:
            # Keep the kernel runnable if CORE_PARALLEL lowering is not
            # available on this jax/libtpu build (correct, just unsharded).
            partials = run(1)
    else:
        partials = run(1)

    # Tiny final cross-lane reduction of the per-core partials in plain JAX.
    total = jnp.sum(partials)
    if tail:
        total = total + tail_sum
    return total


if __name__ == "__main__":
    key = jax.random.PRNGKey(0)
    kx, ky = jax.random.split(key)

    # NCHW inputs, small shapes (128-aligned, copy-free reshape path).
    x = jax.random.normal(kx, (2, 4, 16, 16), dtype=jnp.float32)
    y = jax.random.normal(ky, (2, 4, 16, 16), dtype=jnp.float32)

    loss = jax.block_until_ready(lad_loss(x, y))
    ref = jnp.sum(jnp.abs(x - y) / y.shape[0])
    assert jnp.allclose(loss, ref, rtol=1e-5, atol=1e-5), (loss, ref)

    # Size not a multiple of 128 -> plain-JAX tail sum + masked last block.
    x2 = jax.random.normal(kx, (3, 5, 48, 50), dtype=jnp.float32)
    y2 = jax.random.normal(ky, (3, 5, 48, 50), dtype=jnp.float32)
    l2 = jax.block_until_ready(lad_loss(x2, y2))
    r2 = jnp.sum(jnp.abs(x2 - y2) / y2.shape[0])
    assert jnp.allclose(l2, r2, rtol=1e-4, atol=1e-4), (l2, r2)

    # Bigger case: multiple row-blocks, pl.when-gated partial-block mask.
    x3 = jax.random.normal(kx, (4, 3, 224, 224), dtype=jnp.float32)
    y3 = jax.random.normal(ky, (4, 3, 224, 224), dtype=jnp.float32)
    l3 = jax.block_until_ready(lad_loss(x3, y3))
    r3 = jnp.sum(jnp.abs(x3 - y3) / y3.shape[0])
    assert jnp.allclose(l3, r3, rtol=1e-4, atol=1e-4), (l3, r3)

    print("KERNEL_OK")
</pallas_src>

<mosaic_0001>
module attributes {stable_mosaic.version = 11 : i64} {
  func.func @_lad_kernel(%arg0: i32, %arg1: i32, %arg2: memref<16x128xf32, #tpu.memory_space<vmem>>, %arg3: memref<16x128xf32, #tpu.memory_space<vmem>>, %arg4: memref<8x128xf32, #tpu.memory_space<vmem>>, %arg5: memref<8x128xf32, #tpu.memory_space<vmem>>) attributes {dimension_semantics = [#tpu.dimension_semantics<arbitrary>, #tpu.dimension_semantics<arbitrary>], iteration_bounds = array<i64: 1, 1>, scalar_prefetch = 0 : i64, scratch_operands = 1 : i64, tpu.core_type = #tpu.core_type<tc>, window_params = [{transform_indices = @transform_0, window_bounds = array<i64: 16, 128>}, {transform_indices = @transform_1, window_bounds = array<i64: 16, 128>}, {transform_indices = @transform_2, window_bounds = array<i64: 8, 128>}]} {
    %c0_i32 = arith.constant 0 : i32
    %0 = arith.cmpi eq, %arg1, %c0_i32 : i32
    %1 = arith.extui %0 : i1 to i32
    %c0_i32_0 = arith.constant 0 : i32
    %2 = arith.cmpi ne, %1, %c0_i32_0 : i32
    scf.if %2 {
      %cst_10 = arith.constant 0.000000e+00 : f32
      %15 = vector.broadcast %cst_10 : f32 to vector<8x128xf32>
      %c0_11 = arith.constant 0 : index
      %c0_12 = arith.constant 0 : index
      %16 = vector.load %arg5[%c0_11, %c0_12] : memref<8x128xf32, #tpu.memory_space<vmem>>, vector<8x128xf32>
      tpu.vector_store %arg5[%c0_11, %c0_12], %15 {strides = array<i32>} : memref<8x128xf32, #tpu.memory_space<vmem>>, vector<8x128xf32>,
    } else {
    }
    %c0 = arith.constant 0 : index
    %c0_1 = arith.constant 0 : index
    %3 = vector.load %arg2[%c0, %c0_1] : memref<16x128xf32, #tpu.memory_space<vmem>>, vector<16x128xf32>
    %c0_2 = arith.constant 0 : index
    %c0_3 = arith.constant 0 : index
    %4 = vector.load %arg3[%c0_2, %c0_3] : memref<16x128xf32, #tpu.memory_space<vmem>>, vector<16x128xf32>
    %5 = arith.subf %3, %4 : vector<16x128xf32>
    %6 = math.absf %5 : vector<16x128xf32>
    %c0_4 = arith.constant 0 : index
    %c0_5 = arith.constant 0 : index
    %7 = vector.load %arg5[%c0_4, %c0_5] : memref<8x128xf32, #tpu.memory_space<vmem>>, vector<8x128xf32>
    %8 = vector.shape_cast %6 : vector<16x128xf32> to vector<2x8x128xf32>
    %cst = arith.constant dense<0.000000e+00> : vector<8x128xf32>
    %9 = vector.multi_reduction <add>, %8, %cst [0] : vector<2x8x128xf32> to vector<8x128xf32>
    %10 = arith.addf %7, %9 : vector<8x128xf32>
    %c0_6 = arith.constant 0 : index
    %c0_7 = arith.constant 0 : index
    %11 = vector.load %arg5[%c0_6, %c0_7] : memref<8x128xf32, #tpu.memory_space<vmem>>, vector<8x128xf32>
    tpu.vector_store %arg5[%c0_6, %c0_7], %10 {strides = array<i32>} : memref<8x128xf32, #tpu.memory_space<vmem>>, vector<8x128xf32>,
    %c0_i32_8 = arith.constant 0 : i32
    %12 = arith.cmpi eq, %arg1, %c0_i32_8 : i32
    %13 = arith.extui %12 : i1 to i32
    %c0_i32_9 = arith.constant 0 : i32
    %14 = arith.cmpi ne, %13, %c0_i32_9 : i32
    scf.if %14 {
      %c0_10 = arith.constant 0 : index
      %c0_11 = arith.constant 0 : index
      %15 = vector.load %arg5[%c0_10, %c0_11] : memref<8x128xf32, #tpu.memory_space<vmem>>, vector<8x128xf32>
      %cst_12 = arith.constant 5.000000e-01 : f32
      %16 = vector.broadcast %cst_12 : f32 to vector<8x128xf32>
      %17 = arith.mulf %15, %16 : vector<8x128xf32>
      %c0_13 = arith.constant 0 : index
      %c0_14 = arith.constant 0 : index
      %18 = vector.load %arg4[%c0_13, %c0_14] : memref<8x128xf32, #tpu.memory_space<vmem>>, vector<8x128xf32>
      tpu.vector_store %arg4[%c0_13, %c0_14], %17 {strides = array<i32>} : memref<8x128xf32, #tpu.memory_space<vmem>>, vector<8x128xf32>,
    } else {
    }
    return
  }
  func.func @transform_0(%arg0: i32, %arg1: i32) -> (i32, i32) {
    %c1_i32 = arith.constant 1 : i32
    %0 = arith.muli %arg0, %c1_i32 : i32
    %1 = arith.addi %0, %arg1 : i32
    %c0_i32 = arith.constant 0 : i32
    %c0_i32_0 = arith.constant 0 : i32
    return %1, %c0_i32 : i32, i32
  }
  func.func @transform_1(%arg0: i32, %arg1: i32) -> (i32, i32) {
    %c1_i32 = arith.constant 1 : i32
    %0 = arith.muli %arg0, %c1_i32 : i32
    %1 = arith.addi %0, %arg1 : i32
    %c0_i32 = arith.constant 0 : i32
    %c0_i32_0 = arith.constant 0 : i32
    return %1, %c0_i32 : i32, i32
  }
  func.func @transform_2(%arg0: i32, %arg1: i32) -> (i32, i32) {
    %c0_i32 = arith.constant 0 : i32
    %c0_i32_0 = arith.constant 0 : i32
    return %arg0, %c0_i32 : i32, i32
  }
}

</mosaic_0001>

<llo_original>
// kernel: tpu_custom_call.1
$region0: #{tpu_custom_call.1}
  #allocation0 [shape = 'u32[]', space=smem, size = 0x4, offset = 0x4, fixed_abs, tag = 'smem constant byte address 0x4 - core index']
  #allocation1 [shape = 'u32[144,128]{1,0:T(1,128)}', space=vmem, size = 0x12000, scoped, tag = 'internal scratch']
  #allocation2 [shape = 'f32[8,128]{1,0:T(8,128)}', space=vmem, size = 0x1000, scoped, tag = 'scratch operand']
  %s0 = inlined_call_operand.hbm [shape: f32[16,128], index: 0, kind: input, shape index: {}]
  %s1 = inlined_call_operand.hbm [shape: f32[16,128], index: 1, kind: input, shape index: {}]
  %s2 = inlined_call_operand.hbm [shape: f32[8,128], index: 2, kind: output, shape index: {}]
  %s3 = sld [smem:[#allocation0]]
  $region34: #{tpu_custom_call.1} parent=0
    _
  %s5 = ssub.s32 1, %s3
  %s6 = scalar_select 0, %s5, %s3
  $region1: #{tpu_custom_call.1} parent=0
    #allocation3 [shape = 'u8[8192]{0}', space=vmem, size = 0x2000, scoped, tag = 'input window, operand 0, single buffered']
    #allocation4 [shape = 's32[1]{0}', space=sflag, size = 0x4, scoped, tag = 'scoped memory for tpu_custom_call.1']
    #allocation5 [shape = 's32[1]{0}', space=sflag, size = 0x4, scoped, tag = 'scoped memory for tpu_custom_call.1']
    #allocation6 [shape = 'u8[8192]{0}', space=vmem, size = 0x2000, scoped, tag = 'input window, operand 1, single buffered']
    #allocation7 [shape = 's32[1]{0}', space=sflag, size = 0x4, scoped, tag = 'scoped memory for tpu_custom_call.1']
    #allocation8 [shape = 'u8[4096]{0}', space=vmem, size = 0x1000, scoped, tag = 'output window, operand 0, single buffered']
    %7 = vsyncpa [#allocation4], 0
    %8 = vsyncpa [#allocation7], 0
    %9 = vsyncpa [#allocation5], 0
    // Predicated region
    $region2: #{tpu_custom_call.1} parent=1 // pred_check
      _
    $region3: #{tpu_custom_call.1} parent=1 // pred_check_branch
      %11 = sbr.rel (0) target = $region5
    $region4: #{tpu_custom_call.1} parent=1 // pred_region
      %s12 = sadd.s32 0, 0
      %s13 = smul.u32 2, %s12
      %s15 = ssub.s32 256, 256
      %16 = vsyncadd [#allocation4], %s15
      %s17 = smul.addr %s13, 128
      %s18 = scalar_lea.hbm %s0, %s17
      %s19 = sshll.u32 [#allocation3], 4
      %s20 = int_to_ptr.vmem [resolvable:$true] %s19
      %25 = dma.hbm_to_vmem [thread:$0]  %s18, 256, %s20, [#allocation4], 128, 128, 8
    $region5: #{tpu_custom_call.1} parent=1 // pred_fallthru
      _
    // Predicated region
    $region6: #{tpu_custom_call.1} parent=1 // pred_check
      _
    $region7: #{tpu_custom_call.1} parent=1 // pred_check_branch
      %27 = sbr.rel (0) target = $region9
    $region8: #{tpu_custom_call.1} parent=1 // pred_region
      %s28 = sadd.s32 0, 0
      %s29 = smul.u32 2, %s28
      %s31 = ssub.s32 256, 256
      %32 = vsyncadd [#allocation7], %s31
      %s33 = smul.addr %s29, 128
      %s34 = scalar_lea.hbm %s1, %s33
      %s35 = sshll.u32 [#allocation6], 4
      %s36 = int_to_ptr.vmem [resolvable:$true] %s35
      %41 = dma.hbm_to_vmem [thread:$0]  %s34, 256, %s36, [#allocation7], 128, 128, 8
    $region9: #{tpu_custom_call.1} parent=1 // pred_fallthru
      _
    // Predicated region
    $region10: #{tpu_custom_call.1} parent=1 // pred_check
      _
    $region11: #{tpu_custom_call.1} parent=1 // pred_check_branch
      %43 = sbr.rel (0) target = $region13
    $region12: #{tpu_custom_call.1} parent=1 // pred_region
      %44 = dma.done [#allocation4], 256
    $region13: #{tpu_custom_call.1} parent=1 // pred_fallthru
      _
    // Predicated region
    $region14: #{tpu_custom_call.1} parent=1 // pred_check
      _
    $region15: #{tpu_custom_call.1} parent=1 // pred_check_branch
      %46 = sbr.rel (0) target = $region17
    $region16: #{tpu_custom_call.1} parent=1 // pred_region
      %47 = dma.done [#allocation7], 256
    $region17: #{tpu_custom_call.1} parent=1 // pred_fallthru
      _
    %s48 = sadd.s32 0, 0
    %s49 = smul.u32 2, %s48
    %s50 = sadd.s32 0, 0
    %s51 = smul.u32 2, %s50
    %p52 = scmp.eq.s32.totalorder 0, 0
    // Predicated region
    $region18: #{tpu_custom_call.1} parent=1 // pred_check
      %p53 = pneg %p52
    $region19: #{tpu_custom_call.1} parent=1 // pred_check_branch
      %55 = sbr.rel (%p53) target = $region21
    $region20: #{tpu_custom_call.1} parent=1 // pred_region
      %56 = vst [vmem:[#allocation2] sm:$0xff] 0.0
    $region21: #{tpu_custom_call.1} parent=1 // pred_fallthru
      _
    %v57 = vld [vmem:[#allocation3] sm:$0xff]
    %v58 = vld [vmem:[#allocation3 + $0x8] sm:$0xff]
    %v59 = vld [vmem:[#allocation6] sm:$0xff]
    %v60 = vld [vmem:[#allocation6 + $0x8] sm:$0xff]
    %v61 = vsub.f32 %v57, %v59
    %v62 = vsub.f32 %v58, %v60
    %v63 = vand.u32 2147483647, %v61
    %v64 = vand.u32 2147483647, %v62
    %v65 = vld [vmem:[#allocation2] sm:$0xff]
    %v66 = vadd.f32 %v63, %v64
    %v67 = vadd.f32 %v65, %v66
    %68 = vst [vmem:[#allocation2] sm:$0xff] %v67
    // Predicated region
    $region22: #{tpu_custom_call.1} parent=1 // pred_check
      %p69 = pneg %p52
    $region23: #{tpu_custom_call.1} parent=1 // pred_check_branch
      %71 = sbr.rel (%p69) target = $region25
    $region24: #{tpu_custom_call.1} parent=1 // pred_region
      %v72 = vld [vmem:[#allocation2] sm:$0xff]
      %v73 = vmul.f32 %v72, 0.5
      %74 = vst [vmem:[#allocation8] sm:$0xff] %v73
    $region25: #{tpu_custom_call.1} parent=1 // pred_fallthru
      _
    // Predicated region
    $region26: #{tpu_custom_call.1} parent=1 // pred_check
      _
    $region27: #{tpu_custom_call.1} parent=1 // pred_check_branch
      %76 = sbr.rel (0) target = $region29
    $region28: #{tpu_custom_call.1} parent=1 // pred_region
      %s78 = ssub.s32 128, 128
      %79 = vsyncadd [#allocation5], %s78
      %s81 = sshll.u32 [#allocation8], 4
      %s82 = int_to_ptr.vmem [resolvable:$true] %s81
      %84 = dma.vmem_to_hbm [thread:$0]  %s82, 128, %s2, [#allocation5]
    $region29: #{tpu_custom_call.1} parent=1 // pred_fallthru
      _
    // Predicated region
    $region30: #{tpu_custom_call.1} parent=1 // pred_check
      _
    $region31: #{tpu_custom_call.1} parent=1 // pred_check_branch
      %86 = sbr.rel (0) target = $region33
    $region32: #{tpu_custom_call.1} parent=1 // pred_region
      %87 = dma.done [#allocation5], 128
    $region33: #{tpu_custom_call.1} parent=1 // pred_fallthru
      _
    %88 = vsyncpa [#allocation4], 1
    %89 = vsyncpa [#allocation7], 1
    %90 = vsyncpa [#allocation5], 1

</llo_original>
